<compile_context>
chip_gen: v7x
topology: tpu7x:2x2x1
jax: 0.10.0
libtpu: 0.0.40
codegen_flags: <defaults>
</compile_context>

<pallas_src>
import functools

import jax
import jax.numpy as jnp
from jax.experimental import pallas as pl
from jax.experimental.pallas import tpu as pltpu


def _round_up(n, m):
    return ((n + m - 1) // m) * m


# --------------------------------------------------------------------------
# Kernels
# --------------------------------------------------------------------------
def _mmp_kernel_2d(x_ref, w_full_ref, w_max_ref, b_ref, o_ref, *, C, HW):
    """Small-C path: x block is (TB, C*HW), lane-dense (no sublane padding)."""
    xv = x_ref[...].astype(jnp.float32)                       # (TB, C*HW)

    # ||hidden||_2 over channels per spatial position; sqrt omitted
    # (monotone, only the argmax is needed). Short static unroll (C < 8).
    ch0 = xv[:, :HW]                                           # channel 0 slice
    magsq = ch0 * ch0
    for c in range(1, C):
        xc = xv[:, c * HW:(c + 1) * HW]
        magsq = magsq + xc * xc                                # (TB, HW)

    lane = jax.lax.broadcasted_iota(jnp.int32, magsq.shape, 1)
    mmax = jnp.max(magsq, axis=1, keepdims=True)               # (TB, 1)
    big = jnp.iinfo(jnp.int32).max
    # First spatial index attaining the max (matches torch.max tie-breaking).
    idx = jnp.min(jnp.where(magsq == mmax, lane, big), axis=1, keepdims=True)

    # torch.gather(hidden, 2, max_indices) with a (B,1,1) index picks
    # CHANNEL 0 only, at the max-magnitude spatial position.
    max_t = jnp.sum(jnp.where(lane == idx, ch0, 0.0), axis=1, keepdims=True)

    # Linear on concat(sum_T, max_T): the spatial sum is folded into a
    # replicated (C*HW, OUT) weight, so the whole reduction runs on the MXU.
    pre = (jnp.dot(xv, w_full_ref[...], preferred_element_type=jnp.float32)
           + max_t * w_max_ref[...]
           + b_ref[...])                                       # (TB, OUT)
    pooled = jnp.tanh(pre)

    # F.normalize(p=2, dim=1, eps=1e-12) via EUP rsqrt (free VLIW slot).
    ss = jnp.sum(pooled * pooled, axis=1, keepdims=True)
    o_ref[...] = pooled * jax.lax.rsqrt(jnp.maximum(ss, 1e-24))


def _mmp_kernel_3d(x_ref, w_sum_ref, w_max_ref, b_ref, o_ref):
    """General path: x block is (TB, C, HW)."""
    xv = x_ref[...].astype(jnp.float32)                        # (TB, C, HW)

    magsq = jnp.sum(xv * xv, axis=1)                           # (TB, HW)
    lane = jax.lax.broadcasted_iota(jnp.int32, magsq.shape, 1)
    mmax = jnp.max(magsq, axis=1, keepdims=True)
    big = jnp.iinfo(jnp.int32).max
    idx = jnp.min(jnp.where(magsq == mmax, lane, big), axis=1, keepdims=True)

    ch0 = xv[:, 0, :]                                          # reuse cast value
    max_t = jnp.sum(jnp.where(lane == idx, ch0, 0.0), axis=1, keepdims=True)

    sum_t = jnp.sum(xv, axis=2)                                # (TB, C)
    pre = (jnp.dot(sum_t, w_sum_ref[...], preferred_element_type=jnp.float32)
           + max_t * w_max_ref[...]
           + b_ref[...])                                       # (TB, OUT)
    pooled = jnp.tanh(pre)

    ss = jnp.sum(pooled * pooled, axis=1, keepdims=True)
    o_ref[...] = pooled * jax.lax.rsqrt(jnp.maximum(ss, 1e-24))


# --------------------------------------------------------------------------
# VMEM planning
# --------------------------------------------------------------------------
def _vmem_plan():
    """Generation-aware scoped-VMEM plan. Conservative default = v7x 64 MiB/TC."""
    cap = 64 << 20
    try:
        cap = int(getattr(pltpu.get_tpu_info(), "vmem_capacity_bytes", cap))
    except Exception:
        pass
    # 128 MiB chips (v5e/v6e) -> 64 MiB scoped limit; 64 MiB TC (v7x) -> 40 MiB.
    vmem_limit = max(32 << 20, min(cap - (24 << 20), 64 << 20))
    # Budget for the double-buffered x blocks + the in-kernel f32 live copy,
    # leaving headroom for weights / output buffers / misc intermediates.
    x_budget = vmem_limit - (12 << 20)
    return x_budget, vmem_limit


def _choose_tb(B, padded_row_elems, itemsize, x_budget):
    """Batch tile from padded block bytes: 2x input buffers + one f32 live copy."""
    bytes_per_row = max(1, padded_row_elems * (2 * itemsize + 4))
    tb = max(1, int(x_budget // bytes_per_row))
    if B > 8:
        # Keep >= 2 grid steps so "parallel" can use v7x's second TensorCore.
        tb = min(tb, _round_up((B + 1) // 2, 8))
    if tb >= B:
        return B
    tb = max(8, (tb // 8) * 8)
    return B if tb >= B else tb


# --------------------------------------------------------------------------
# Wrapper
# --------------------------------------------------------------------------
def mean_max_pool(x, weight, bias, *, tb=None):
    B, C, H, W = x.shape
    HW = H * W
    out_ch = weight.shape[0]

    # TODO(synk): nn.Linear in __init__ declares in_features = 2*C*H*W, but the
    # forward flattens C_mmt to (B, C+1); the PyTorch module as written would
    # error unless those sizes coincide. We keep the __init__-shaped weight and
    # apply its first C+1 input columns (the feature vector forward() builds).
    w_sum = weight[:, :C].T.astype(jnp.float32)           # (C, OUT)
    w_max = weight[:, C:C + 1].T.astype(jnp.float32)      # (1, OUT)
    b2 = bias.reshape(1, out_ch).astype(jnp.float32)      # (1, OUT)

    use_2d = C < 8
    itemsize = jnp.dtype(x.dtype).itemsize
    if use_2d:
        padded_row = _round_up(C * HW, 128)
    else:
        padded_row = _round_up(C, 8) * _round_up(HW, 128)

    x_budget, vmem_limit = _vmem_plan()
    if tb is None:
        tb = _choose_tb(B, padded_row, itemsize, x_budget)
    else:
        tb = min(int(tb), B)
        if tb < B:
            tb = max(8, (tb // 8) * 8)
            if tb >= B:
                tb = B
    n_blk = pl.cdiv(B, tb)
    # No wrapper-side padding: Pallas handles the ragged last block (rows are
    # independent; the OOB tail computes on garbage and its store is masked).

    cparams = pltpu.CompilerParams(
        dimension_semantics=("parallel",),
        vmem_limit_bytes=int(vmem_limit),
    )

    if use_2d:
        x2 = x.reshape(B, C * HW)                          # native dtype on the wire
        # Fold the spatial sum into a replicated weight -> single MXU matmul.
        w_full = jnp.repeat(w_sum, HW, axis=0)             # (C*HW, OUT)
        kernel = functools.partial(_mmp_kernel_2d, C=C, HW=HW)
        cost = pl.CostEstimate(
            flops=int(B * (3 * C * HW + 2 * C * HW * out_ch + 8 * out_ch)),
            transcendentals=int(B * (out_ch + 1)),
            bytes_accessed=int(B * C * HW * itemsize + B * out_ch * 4
                               + (C * HW + 2) * out_ch * 4),
        )
        return pl.pallas_call(
            kernel,
            out_shape=jax.ShapeDtypeStruct((B, out_ch), jnp.float32),
            grid=(n_blk,),
            in_specs=[
                pl.BlockSpec((tb, C * HW), lambda i: (i, 0)),
                pl.BlockSpec((C * HW, out_ch), lambda i: (0, 0)),
                pl.BlockSpec((1, out_ch), lambda i: (0, 0)),
                pl.BlockSpec((1, out_ch), lambda i: (0, 0)),
            ],
            out_specs=pl.BlockSpec((tb, out_ch), lambda i: (i, 0)),
            compiler_params=cparams,
            cost_estimate=cost,
        )(x2, w_full, w_max, b2)

    # General (larger-C) path: (B, C, HW) layout.
    x3 = x.reshape(B, C, HW)
    cost = pl.CostEstimate(
        flops=int(B * (4 * C * HW + 2 * C * out_ch + 8 * out_ch)),
        transcendentals=int(B * (out_ch + 1)),
        bytes_accessed=int(B * C * HW * itemsize + B * out_ch * 4
                           + (C + 2) * out_ch * 4),
    )
    return pl.pallas_call(
        _mmp_kernel_3d,
        out_shape=jax.ShapeDtypeStruct((B, out_ch), jnp.float32),
        grid=(n_blk,),
        in_specs=[
            pl.BlockSpec((tb, C, HW), lambda i: (i, 0, 0)),
            pl.BlockSpec((C, out_ch), lambda i: (0, 0)),
            pl.BlockSpec((1, out_ch), lambda i: (0, 0)),
            pl.BlockSpec((1, out_ch), lambda i: (0, 0)),
        ],
        out_specs=pl.BlockSpec((tb, out_ch), lambda i: (i, 0)),
        compiler_params=cparams,
        cost_estimate=cost,
    )(x3, w_sum, w_max, b2)


def mean_max_pool_ref(x, weight, bias):
    """Plain-JAX reference mirroring the PyTorch forward (same weight slicing)."""
    B, C, H, W = x.shape
    hs = x.reshape(B, C, -1).astype(jnp.float32)
    mag = jnp.linalg.norm(hs, axis=1, keepdims=True)                  # (B,1,HW)
    max_idx = jnp.argmax(mag, axis=2)                                 # (B,1)
    max_t = jnp.take_along_axis(hs[:, 0:1, :], max_idx[:, :, None], axis=2)
    sum_t = jnp.sum(hs, axis=2, keepdims=True)                        # (B,C,1)
    cmmt = jnp.concatenate([sum_t, max_t], axis=1).reshape(B, -1)     # (B,C+1)
    pooled = jnp.tanh(cmmt @ weight[:, : C + 1].T + bias)
    denom = jnp.maximum(jnp.linalg.norm(pooled, axis=1, keepdims=True), 1e-12)
    return pooled / denom


if __name__ == "__main__":
    key = jax.random.PRNGKey(0)
    kx, kw, kb, kx2, kx3, kw3, kb3 = jax.random.split(key, 7)

    # --- small-C path (2-D lane-dense layout, folded-MXU weight) ---
    B, C, H, W, OUT = 2, 4, 16, 16, 32
    x = jax.random.normal(kx, (B, C, H, W), dtype=jnp.float32)
    in_features = 2 * C * H * W
    bound = 1.0 / float(jnp.sqrt(in_features))
    weight = jax.random.uniform(kw, (OUT, in_features), jnp.float32, -bound, bound)
    bias = jax.random.uniform(kb, (OUT,), jnp.float32, -bound, bound)

    out = jax.block_until_ready(mean_max_pool(x, weight, bias))
    ref = jax.block_until_ready(mean_max_pool_ref(x, weight, bias))
    assert out.shape == (B, OUT), out.shape
    assert jnp.allclose(out, ref, atol=1e-4, rtol=1e-4), float(
        jnp.max(jnp.abs(out - ref)))

    # Multi-block + ragged last block (no wrapper-side padding).
    B2 = 20
    x2 = jax.random.normal(kx2, (B2, C, H, W), dtype=jnp.float32)
    out2 = jax.block_until_ready(mean_max_pool(x2, weight, bias, tb=8))
    ref2 = jax.block_until_ready(mean_max_pool_ref(x2, weight, bias))
    assert out2.shape == (B2, OUT), out2.shape
    assert jnp.allclose(out2, ref2, atol=1e-4, rtol=1e-4), float(
        jnp.max(jnp.abs(out2 - ref2)))

    # --- large-C fallback path (3-D layout), auto tile + >=2-block grid ---
    B3, C3, H3, W3, OUT3 = 24, 32, 8, 8, 32
    x3 = jax.random.normal(kx3, (B3, C3, H3, W3), dtype=jnp.float32)
    in_feat3 = 2 * C3 * H3 * W3
    bound3 = 1.0 / float(jnp.sqrt(in_feat3))
    weight3 = jax.random.uniform(kw3, (OUT3, in_feat3), jnp.float32, -bound3, bound3)
    bias3 = jax.random.uniform(kb3, (OUT3,), jnp.float32, -bound3, bound3)
    out3 = jax.block_until_ready(mean_max_pool(x3, weight3, bias3))
    ref3 = jax.block_until_ready(mean_max_pool_ref(x3, weight3, bias3))
    assert out3.shape == (B3, OUT3), out3.shape
    assert jnp.allclose(out3, ref3, atol=1e-4, rtol=1e-4), float(
        jnp.max(jnp.abs(out3 - ref3)))

    print("KERNEL_OK")
</pallas_src>

<mosaic_0001>
module attributes {stable_mosaic.version = 11 : i64} {
  func.func @_mmp_kernel_2d(%arg0: i32, %arg1: memref<2x1024xf32, #tpu.memory_space<vmem>>, %arg2: memref<1024x32xf32, #tpu.memory_space<vmem>>, %arg3: memref<1x32xf32, #tpu.memory_space<vmem>>, %arg4: memref<1x32xf32, #tpu.memory_space<vmem>>, %arg5: memref<2x32xf32, #tpu.memory_space<vmem>>) attributes {dimension_semantics = [#tpu.dimension_semantics<parallel>], iteration_bounds = array<i64: 1>, scalar_prefetch = 0 : i64, scratch_operands = 0 : i64, tpu.core_type = #tpu.core_type<tc>, window_params = [{transform_indices = @transform_0, window_bounds = array<i64: 2, 1024>}, {pipeline_mode = #tpu.pipeline_mode<synchronous>, transform_indices = @transform_1, window_bounds = array<i64: 1024, 32>}, {pipeline_mode = #tpu.pipeline_mode<synchronous>, transform_indices = @transform_2, window_bounds = array<i64: 1, 32>}, {pipeline_mode = #tpu.pipeline_mode<synchronous>, transform_indices = @transform_3, window_bounds = array<i64: 1, 32>}, {transform_indices = @transform_4, window_bounds = array<i64: 2, 32>}]} {
    %c0 = arith.constant 0 : index
    %c0_0 = arith.constant 0 : index
    %0 = vector.load %arg1[%c0, %c0_0] : memref<2x1024xf32, #tpu.memory_space<vmem>>, vector<2x1024xf32>
    %1 = vector.extract_strided_slice %0 {offsets = [0, 0], sizes = [2, 256], strides = [1, 1]} : vector<2x1024xf32> to vector<2x256xf32>
    %2 = arith.mulf %1, %1 : vector<2x256xf32>
    %3 = vector.extract_strided_slice %0 {offsets = [0, 256], sizes = [2, 256], strides = [1, 1]} : vector<2x1024xf32> to vector<2x256xf32>
    %4 = arith.mulf %3, %3 : vector<2x256xf32>
    %5 = arith.addf %2, %4 : vector<2x256xf32>
    %6 = vector.extract_strided_slice %0 {offsets = [0, 512], sizes = [2, 256], strides = [1, 1]} : vector<2x1024xf32> to vector<2x256xf32>
    %7 = arith.mulf %6, %6 : vector<2x256xf32>
    %8 = arith.addf %5, %7 : vector<2x256xf32>
    %9 = vector.extract_strided_slice %0 {offsets = [0, 768], sizes = [2, 256], strides = [1, 1]} : vector<2x1024xf32> to vector<2x256xf32>
    %10 = arith.mulf %9, %9 : vector<2x256xf32>
    %11 = arith.addf %8, %10 : vector<2x256xf32>
    %12 = tpu.iota {dimensions = array<i32: 1>} : vector<2x256xi32>
    %cst = arith.constant dense<0xFF800000> : vector<2xf32>
    %13 = vector.multi_reduction <maximumf>, %11, %cst [1] : vector<2x256xf32> to vector<2xf32>
    %14 = vector.shape_cast %13 : vector<2xf32> to vector<2x1xf32>
    %15 = vector.broadcast %14 : vector<2x1xf32> to vector<2x256xf32>
    %16 = arith.cmpf oeq, %11, %15 : vector<2x256xf32>
    %c2147483647_i32 = arith.constant 2147483647 : i32
    %17 = vector.broadcast %c2147483647_i32 : i32 to vector<2x256xi32>
    %18 = arith.select %16, %12, %17 : vector<2x256xi1>, vector<2x256xi32>
    %cst_1 = arith.constant dense<2147483647> : vector<2xi32>
    %19 = vector.multi_reduction <minsi>, %18, %cst_1 [1] : vector<2x256xi32> to vector<2xi32>
    %20 = vector.shape_cast %19 : vector<2xi32> to vector<2x1xi32>
    %21 = vector.broadcast %20 : vector<2x1xi32> to vector<2x256xi32>
    %22 = arith.cmpi eq, %12, %21 : vector<2x256xi32>
    %cst_2 = arith.constant 0.000000e+00 : f32
    %23 = vector.broadcast %cst_2 : f32 to vector<2x256xf32>
    %24 = arith.select %22, %1, %23 : vector<2x256xi1>, vector<2x256xf32>
    %cst_3 = arith.constant dense<0.000000e+00> : vector<2xf32>
    %25 = vector.multi_reduction <add>, %24, %cst_3 [1] : vector<2x256xf32> to vector<2xf32>
    %26 = vector.shape_cast %25 : vector<2xf32> to vector<2x1xf32>
    %c0_4 = arith.constant 0 : index
    %c0_5 = arith.constant 0 : index
    %27 = vector.load %arg2[%c0_4, %c0_5] : memref<1024x32xf32, #tpu.memory_space<vmem>>, vector<1024x32xf32>
    %cst_6 = arith.constant dense<0.000000e+00> : vector<2x32xf32>
    %28 = tpu.matmul %0, %27, %cst_6 {dimension_numbers = #tpu.dot_dimension_numbers<[1], [0], [0], [1], [0, 0, 1, 1], [], []>} : vector<2x1024xf32>, vector<1024x32xf32>, vector<2x32xf32> -> vector<2x32xf32>
    %c0_7 = arith.constant 0 : index
    %c0_8 = arith.constant 0 : index
    %29 = vector.load %arg3[%c0_7, %c0_8] : memref<1x32xf32, #tpu.memory_space<vmem>>, vector<1x32xf32>
    %30 = vector.broadcast %26 : vector<2x1xf32> to vector<2x32xf32>
    %31 = vector.broadcast %29 : vector<1x32xf32> to vector<2x32xf32>
    %32 = arith.mulf %30, %31 : vector<2x32xf32>
    %33 = arith.addf %28, %32 : vector<2x32xf32>
    %c0_9 = arith.constant 0 : index
    %c0_10 = arith.constant 0 : index
    %34 = vector.load %arg4[%c0_9, %c0_10] : memref<1x32xf32, #tpu.memory_space<vmem>>, vector<1x32xf32>
    %35 = vector.broadcast %34 : vector<1x32xf32> to vector<2x32xf32>
    %36 = arith.addf %33, %35 : vector<2x32xf32>
    %37 = math.tanh %36 : vector<2x32xf32>
    %38 = arith.mulf %37, %37 : vector<2x32xf32>
    %cst_11 = arith.constant dense<0.000000e+00> : vector<2xf32>
    %39 = vector.multi_reduction <add>, %38, %cst_11 [1] : vector<2x32xf32> to vector<2xf32>
    %40 = vector.shape_cast %39 : vector<2xf32> to vector<2x1xf32>
    %cst_12 = arith.constant 1.000000e-24 : f32
    %41 = vector.broadcast %cst_12 : f32 to vector<2x1xf32>
    %42 = arith.maximumf %40, %41 : vector<2x1xf32>
    %43 = math.rsqrt %42 : vector<2x1xf32>
    %44 = vector.broadcast %43 : vector<2x1xf32> to vector<2x32xf32>
    %45 = arith.mulf %37, %44 : vector<2x32xf32>
    %c0_13 = arith.constant 0 : index
    %c0_14 = arith.constant 0 : index
    %46 = vector.load %arg5[%c0_13, %c0_14] : memref<2x32xf32, #tpu.memory_space<vmem>>, vector<2x32xf32>
    tpu.vector_store %arg5[%c0_13, %c0_14], %45 {strides = array<i32>} : memref<2x32xf32, #tpu.memory_space<vmem>>, vector<2x32xf32>,
    return
  }
  func.func @transform_0(%arg0: i32) -> (i32, i32) {
    %c0_i32 = arith.constant 0 : i32
    %c0_i32_0 = arith.constant 0 : i32
    return %arg0, %c0_i32 : i32, i32
  }
  func.func @transform_1(%arg0: i32) -> (i32, i32) {
    %c0_i32 = arith.constant 0 : i32
    %c0_i32_0 = arith.constant 0 : i32
    %c0_i32_1 = arith.constant 0 : i32
    return %c0_i32, %c0_i32_0 : i32, i32
  }
  func.func @transform_2(%arg0: i32) -> (i32, i32) {
    %c0_i32 = arith.constant 0 : i32
    %c0_i32_0 = arith.constant 0 : i32
    %c0_i32_1 = arith.constant 0 : i32
    return %c0_i32, %c0_i32_0 : i32, i32
  }
  func.func @transform_3(%arg0: i32) -> (i32, i32) {
    %c0_i32 = arith.constant 0 : i32
    %c0_i32_0 = arith.constant 0 : i32
    %c0_i32_1 = arith.constant 0 : i32
    return %c0_i32, %c0_i32_0 : i32, i32
  }
  func.func @transform_4(%arg0: i32) -> (i32, i32) {
    %c0_i32 = arith.constant 0 : i32
    %c0_i32_0 = arith.constant 0 : i32
    return %arg0, %c0_i32 : i32, i32
  }
}

</mosaic_0001>

<llo_original>
// kernel: tpu_custom_call.1
$region0: #{tpu_custom_call.1}
  #allocation0 [shape = 'u32[]', space=smem, size = 0x4, offset = 0x4, fixed_abs, tag = 'smem constant byte address 0x4 - core index']
  #allocation1 [shape = 'u32[144,128]{1,0:T(1,128)}', space=vmem, size = 0x12000, scoped, tag = 'internal scratch']
  %s0 = inlined_call_operand.vmem [shape: f32[2,1024], index: 0, kind: input, shape index: {}]
  %s1 = inlined_call_operand.vmem [shape: f32[1024,32], index: 1, kind: input, shape index: {}]
  %s2 = inlined_call_operand.vmem [shape: f32[1,32], index: 2, kind: input, shape index: {}]
  %s3 = inlined_call_operand.vmem [shape: f32[1,32], index: 3, kind: input, shape index: {}]
  %s4 = inlined_call_operand.hbm [shape: f32[2,32], index: 4, kind: output, shape index: {}]
  %s5 = sld [smem:[#allocation0]]
  $region26: #{tpu_custom_call.1} parent=0
    _
  %s7 = ssub.s32 1, %s5
  %s8 = scalar_select 0, %s7, %s5
  $region1: #{tpu_custom_call.1} parent=0
    #allocation2 [shape = 'u8[1024]{0}', space=vmem, size = 0x400, scoped, tag = 'output window, operand 0, single buffered']
    #allocation3 [shape = 's32[1]{0}', space=sflag, size = 0x4, scoped, tag = 'scoped memory for tpu_custom_call.1']
    %9 = vsyncpa [#allocation3], 0
    // Predicated region
    $region2: #{tpu_custom_call.1} parent=1 // pred_check
      _
    $region3: #{tpu_custom_call.1} parent=1 // pred_check_branch
      %11 = sbr.rel (0) target = $region5
    $region4: #{tpu_custom_call.1} parent=1 // pred_region
      _
    $region5: #{tpu_custom_call.1} parent=1 // pred_fallthru
      _
    // Predicated region
    $region6: #{tpu_custom_call.1} parent=1 // pred_check
      _
    $region7: #{tpu_custom_call.1} parent=1 // pred_check_branch
      %13 = sbr.rel (0) target = $region9
    $region8: #{tpu_custom_call.1} parent=1 // pred_region
      _
    $region9: #{tpu_custom_call.1} parent=1 // pred_fallthru
      _
    // Predicated region
    $region10: #{tpu_custom_call.1} parent=1 // pred_check
      _
    $region11: #{tpu_custom_call.1} parent=1 // pred_check_branch
      %15 = sbr.rel (0) target = $region13
    $region12: #{tpu_custom_call.1} parent=1 // pred_region
      _
    $region13: #{tpu_custom_call.1} parent=1 // pred_fallthru
      _
    // Predicated region
    $region14: #{tpu_custom_call.1} parent=1 // pred_check
      _
    $region15: #{tpu_custom_call.1} parent=1 // pred_check_branch
      %17 = sbr.rel (0) target = $region17
    $region16: #{tpu_custom_call.1} parent=1 // pred_region
      _
    $region17: #{tpu_custom_call.1} parent=1 // pred_fallthru
      _
    %v18 = vld [vmem:[%s0] sm:$0xff]
    %v19 = vld [vmem:[%s0 + $0x8] sm:$0xff]
    %v20 = vmul.f32 %v18, %v18
    %v22 = vrot.slane %v18, 4
    %v24 = vmul.f32 %v22, %v22
    %v25 = vadd.f32 %v20, %v24
    %v26 = vmul.f32 %v19, %v19
    %v27 = vadd.f32 %v25, %v26
    %v29 = vrot.slane %v19, 4
    %v31 = vmul.f32 %v29, %v29
    %v32 = vadd.f32 %v27, %v31
    %v33 = vlaneseq
    %v34 = vand.u32 %v33, 127
    %v35 = vadd.s32 %v34, 128
    %v38 = vunpack.c.l.s4 1983009808
    %v39 = vunpack.c.0.s8 %v38
    %v40 = vlaneseq
    %v41 = vshrl.u32 %v40, 7
    %v42 = vsub.s32 %v39, %v41
    %v43 = vrot.slane %v32, %v42
    %v44 = vcombine.high %v43, %v43
    %vm47 = vcmask 1041408
    %v48 = vsel %vm47, %v43, -inf
    %v49 = vsel %vm47, %v44, -inf
    %v50 = vmax.f32 %v48, %v49
    %51 = vmax.xlane.f32.xlu0 %v50
    %v52 = vpop.xlane.xlu0 %51
    %v55 = vunpack.c.l.s4 269488144
    %v56 = vunpack.c.0.s8 %v55
    %v57 = vlaneseq
    %v58 = vshrl.u32 %v57, 7
    %v59 = vsub.s32 %v56, %v58
    %v60 = vrot.slane %v52, %v59
    %vm62 = vcmp.eq.f32.partialorder %v32, %v60
    %v63 = vcombine.low %v34, %v35
    %v65 = vunpack.c.l.s4 1983009808
    %v66 = vunpack.c.0.s8 %v65
    %v67 = vlaneseq
    %v68 = vshrl.u32 %v67, 7
    %v69 = vsub.s32 %v66, %v68
    %v70 = vrot.slane %v63, %v69
    %v71 = vsel %vm62, %v70, 2147483647
    %v73 = vunpack.c.l.s4 1983009808
    %v74 = vunpack.c.0.s8 %v73
    %v75 = vlaneseq
    %v76 = vshrl.u32 %v75, 7
    %v77 = vsub.s32 %v74, %v76
    %v78 = vrot.slane %v71, %v77
    %v79 = vcombine.high %v78, %v78
    %v80 = vsel %vm47, %v78, 2147483647
    %v81 = vsel %vm47, %v79, 2147483647
    %vm82 = vcmp.lt.s32.totalorder %v80, %v81
    %v83 = vsel %vm82, %v80, %v81
    %v84 = vand.u32 %v83, 65535
    %v85 = vshra.s32 %v83, 16
    %v86 = vcvt.s32.f32 %v84
    %v87 = vcvt.s32.f32 %v85
    %88 = vmin.xlane.f32.xlu0 %v87
    %v89 = vpop.xlane.xlu0 %88
    %vm90 = vcmp.eq.f32.partialorder %v87, %v89
    %v91 = vsel %vm90, %v86, inf
    %92 = vmin.xlane.f32.xlu0 %v91
    %v93 = vpop.xlane.xlu0 %92
    %v94 = vcvt.f32.s32 %v93
    %v95 = vcvt.f32.s32 %v89
    %v96 = vshll.u32 %v95, 16
    %v97 = vadd.s32 %v96, %v94
    %vm98 = vcmp.eq.s32.totalorder %v34, %v97
    %vm99 = vcmp.eq.s32.totalorder %v35, %v97
    %v101 = vunpack.c.l.s4 1983009808
    %v102 = vunpack.c.0.s8 %v101
    %v103 = vlaneseq
    %v104 = vshrl.u32 %v103, 7
    %v105 = vsub.s32 %v102, %v104
    %v106 = vrot.slane %v18, %v105
    %v107 = vcombine.high %v106, %v106
    %v110 = vsel %vm98, %v106, 0.0
    %v111 = vsel %vm99, %v107, 0.0
    %v112 = vsel %vm47, %v110, 0.0
    %v113 = vsel %vm47, %v111, 0.0
    %v114 = vadd.f32 %v112, %v113
    %115 = vadd.xlane.f32.xlu0 %v114
    %v116 = vpop.xlane.xlu0 %115
    %v117 = vld [vmem:[%s1] sm:$0xff]
    %v118 = vld [vmem:[%s1 + $0x8] sm:$0xff]
    %v119 = vld [vmem:[%s1 + $0x10] sm:$0xff]
    %v120 = vld [vmem:[%s1 + $0x18] sm:$0xff]
    %v121 = vld [vmem:[%s1 + $0x20] sm:$0xff]
    %v122 = vld [vmem:[%s1 + $0x28] sm:$0xff]
    %v123 = vld [vmem:[%s1 + $0x30] sm:$0xff]
    %v124 = vld [vmem:[%s1 + $0x38] sm:$0xff]
    %v125 = vld [vmem:[%s1 + $0x40] sm:$0xff]
    %v126 = vld [vmem:[%s1 + $0x48] sm:$0xff]
    %v127 = vld [vmem:[%s1 + $0x50] sm:$0xff]
    %v128 = vld [vmem:[%s1 + $0x58] sm:$0xff]
    %v129 = vld [vmem:[%s1 + $0x60] sm:$0xff]
    %v130 = vld [vmem:[%s1 + $0x68] sm:$0xff]
    %v131 = vld [vmem:[%s1 + $0x70] sm:$0xff]
    %v132 = vld [vmem:[%s1 + $0x78] sm:$0xff]
    %v133 = vld [vmem:[%s1 + $0x80] sm:$0xff]
    %v134 = vld [vmem:[%s1 + $0x88] sm:$0xff]
    %v135 = vld [vmem:[%s1 + $0x90] sm:$0xff]
    %v136 = vld [vmem:[%s1 + $0x98] sm:$0xff]
    %v137 = vld [vmem:[%s1 + $0xa0] sm:$0xff]
    %v138 = vld [vmem:[%s1 + $0xa8] sm:$0xff]
    %v139 = vld [vmem:[%s1 + $0xb0] sm:$0xff]
    %v140 = vld [vmem:[%s1 + $0xb8] sm:$0xff]
    %v141 = vld [vmem:[%s1 + $0xc0] sm:$0xff]
    %v142 = vld [vmem:[%s1 + $0xc8] sm:$0xff]
    %v143 = vld [vmem:[%s1 + $0xd0] sm:$0xff]
    %v144 = vld [vmem:[%s1 + $0xd8] sm:$0xff]
    %v145 = vld [vmem:[%s1 + $0xe0] sm:$0xff]
    %v146 = vld [vmem:[%s1 + $0xe8] sm:$0xff]
    %v147 = vld [vmem:[%s1 + $0xf0] sm:$0xff]
    %v148 = vld [vmem:[%s1 + $0xf8] sm:$0xff]
    %v149 = vld [vmem:[%s1 + $0x100] sm:$0xff]
    %v150 = vld [vmem:[%s1 + $0x108] sm:$0xff]
    %v151 = vld [vmem:[%s1 + $0x110] sm:$0xff]
    %v152 = vld [vmem:[%s1 + $0x118] sm:$0xff]
    %v153 = vld [vmem:[%s1 + $0x120] sm:$0xff]
    %v154 = vld [vmem:[%s1 + $0x128] sm:$0xff]
    %v155 = vld [vmem:[%s1 + $0x130] sm:$0xff]
    %v156 = vld [vmem:[%s1 + $0x138] sm:$0xff]
    %v157 = vld [vmem:[%s1 + $0x140] sm:$0xff]
    %v158 = vld [vmem:[%s1 + $0x148] sm:$0xff]
    %v159 = vld [vmem:[%s1 + $0x150] sm:$0xff]
    %v160 = vld [vmem:[%s1 + $0x158] sm:$0xff]
    %v161 = vld [vmem:[%s1 + $0x160] sm:$0xff]
    %v162 = vld [vmem:[%s1 + $0x168] sm:$0xff]
    %v163 = vld [vmem:[%s1 + $0x170] sm:$0xff]
    %v164 = vld [vmem:[%s1 + $0x178] sm:$0xff]
    %v165 = vld [vmem:[%s1 + $0x180] sm:$0xff]
    %v166 = vld [vmem:[%s1 + $0x188] sm:$0xff]
    %v167 = vld [vmem:[%s1 + $0x190] sm:$0xff]
    %v168 = vld [vmem:[%s1 + $0x198] sm:$0xff]
    %v169 = vld [vmem:[%s1 + $0x1a0] sm:$0xff]
    %v170 = vld [vmem:[%s1 + $0x1a8] sm:$0xff]
    %v171 = vld [vmem:[%s1 + $0x1b0] sm:$0xff]
    %v172 = vld [vmem:[%s1 + $0x1b8] sm:$0xff]
    %v173 = vld [vmem:[%s1 + $0x1c0] sm:$0xff]
    %v174 = vld [vmem:[%s1 + $0x1c8] sm:$0xff]
    %v175 = vld [vmem:[%s1 + $0x1d0] sm:$0xff]
    %v176 = vld [vmem:[%s1 + $0x1d8] sm:$0xff]
    %v177 = vld [vmem:[%s1 + $0x1e0] sm:$0xff]
    %v178 = vld [vmem:[%s1 + $0x1e8] sm:$0xff]
    %v179 = vld [vmem:[%s1 + $0x1f0] sm:$0xff]
    %v180 = vld [vmem:[%s1 + $0x1f8] sm:$0xff]
    %v181 = vld [vmem:[%s1 + $0x200] sm:$0xff]
    %v182 = vld [vmem:[%s1 + $0x208] sm:$0xff]
    %v183 = vld [vmem:[%s1 + $0x210] sm:$0xff]
    %v184 = vld [vmem:[%s1 + $0x218] sm:$0xff]
    %v185 = vld [vmem:[%s1 + $0x220] sm:$0xff]
    %v186 = vld [vmem:[%s1 + $0x228] sm:$0xff]
    %v187 = vld [vmem:[%s1 + $0x230] sm:$0xff]
    %v188 = vld [vmem:[%s1 + $0x238] sm:$0xff]
    %v189 = vld [vmem:[%s1 + $0x240] sm:$0xff]
    %v190 = vld [vmem:[%s1 + $0x248] sm:$0xff]
    %v191 = vld [vmem:[%s1 + $0x250] sm:$0xff]
    %v192 = vld [vmem:[%s1 + $0x258] sm:$0xff]
    %v193 = vld [vmem:[%s1 + $0x260] sm:$0xff]
    %v194 = vld [vmem:[%s1 + $0x268] sm:$0xff]
    %v195 = vld [vmem:[%s1 + $0x270] sm:$0xff]
    %v196 = vld [vmem:[%s1 + $0x278] sm:$0xff]
    %v197 = vld [vmem:[%s1 + $0x280] sm:$0xff]
    %v198 = vld [vmem:[%s1 + $0x288] sm:$0xff]
    %v199 = vld [vmem:[%s1 + $0x290] sm:$0xff]
    %v200 = vld [vmem:[%s1 + $0x298] sm:$0xff]
    %v201 = vld [vmem:[%s1 + $0x2a0] sm:$0xff]
    %v202 = vld [vmem:[%s1 + $0x2a8] sm:$0xff]
    %v203 = vld [vmem:[%s1 + $0x2b0] sm:$0xff]
    %v204 = vld [vmem:[%s1 + $0x2b8] sm:$0xff]
    %v205 = vld [vmem:[%s1 + $0x2c0] sm:$0xff]
    %v206 = vld [vmem:[%s1 + $0x2c8] sm:$0xff]
    %v207 = vld [vmem:[%s1 + $0x2d0] sm:$0xff]
    %v208 = vld [vmem:[%s1 + $0x2d8] sm:$0xff]
    %v209 = vld [vmem:[%s1 + $0x2e0] sm:$0xff]
    %v210 = vld [vmem:[%s1 + $0x2e8] sm:$0xff]
    %v211 = vld [vmem:[%s1 + $0x2f0] sm:$0xff]
    %v212 = vld [vmem:[%s1 + $0x2f8] sm:$0xff]
    %v213 = vld [vmem:[%s1 + $0x300] sm:$0xff]
    %v214 = vld [vmem:[%s1 + $0x308] sm:$0xff]
    %v215 = vld [vmem:[%s1 + $0x310] sm:$0xff]
    %v216 = vld [vmem:[%s1 + $0x318] sm:$0xff]
    %v217 = vld [vmem:[%s1 + $0x320] sm:$0xff]
    %v218 = vld [vmem:[%s1 + $0x328] sm:$0xff]
    %v219 = vld [vmem:[%s1 + $0x330] sm:$0xff]
    %v220 = vld [vmem:[%s1 + $0x338] sm:$0xff]
    %v221 = vld [vmem:[%s1 + $0x340] sm:$0xff]
    %v222 = vld [vmem:[%s1 + $0x348] sm:$0xff]
    %v223 = vld [vmem:[%s1 + $0x350] sm:$0xff]
    %v224 = vld [vmem:[%s1 + $0x358] sm:$0xff]
    %v225 = vld [vmem:[%s1 + $0x360] sm:$0xff]
    %v226 = vld [vmem:[%s1 + $0x368] sm:$0xff]
    %v227 = vld [vmem:[%s1 + $0x370] sm:$0xff]
    %v228 = vld [vmem:[%s1 + $0x378] sm:$0xff]
    %v229 = vld [vmem:[%s1 + $0x380] sm:$0xff]
    %v230 = vld [vmem:[%s1 + $0x388] sm:$0xff]
    %v231 = vld [vmem:[%s1 + $0x390] sm:$0xff]
    %v232 = vld [vmem:[%s1 + $0x398] sm:$0xff]
    %v233 = vld [vmem:[%s1 + $0x3a0] sm:$0xff]
    %v234 = vld [vmem:[%s1 + $0x3a8] sm:$0xff]
    %v235 = vld [vmem:[%s1 + $0x3b0] sm:$0xff]
    %v236 = vld [vmem:[%s1 + $0x3b8] sm:$0xff]
    %v237 = vld [vmem:[%s1 + $0x3c0] sm:$0xff]
    %v238 = vld [vmem:[%s1 + $0x3c8] sm:$0xff]
    %v239 = vld [vmem:[%s1 + $0x3d0] sm:$0xff]
    %v240 = vld [vmem:[%s1 + $0x3d8] sm:$0xff]
    %v241 = vld [vmem:[%s1 + $0x3e0] sm:$0xff]
    %v242 = vld [vmem:[%s1 + $0x3e8] sm:$0xff]
    %v243 = vld [vmem:[%s1 + $0x3f0] sm:$0xff]
    %v244 = vld [vmem:[%s1 + $0x3f8] sm:$0xff]
    %v245 = vld [vmem:[%s2] sm:$0x1]
    %v247 = vlaneseq
    %v248 = vshrl.u32 %v247, 7
    %v249 = vsub.s32 0, %v248
    %v250 = vrot.slane %v245, %v249
    %v252 = vmul.f32 %v116, %v250
    %v253 = vcombine.high %v18, %v18
    %v255 = vunpack.c.l.s4 1983009808
    %v256 = vunpack.c.0.s8 %v255
    %v257 = vlaneseq
    %v258 = vshrl.u32 %v257, 7
    %v259 = vsub.s32 %v256, %v258
    %v260 = vrot.slane %v253, %v259
    %v261 = vcombine.high %v260, %v260
    %v262 = vcombine.high %v19, %v19
    %v264 = vunpack.c.l.s4 1983009808
    %v265 = vunpack.c.0.s8 %v264
    %v266 = vlaneseq
    %v267 = vshrl.u32 %v266, 7
    %v268 = vsub.s32 %v265, %v267
    %v269 = vrot.slane %v19, %v268
    %v271 = vunpack.c.l.s4 1983009808
    %v272 = vunpack.c.0.s8 %v271
    %v273 = vlaneseq
    %v274 = vshrl.u32 %v273, 7
    %v275 = vsub.s32 %v272, %v274
    %v276 = vrot.slane %v262, %v275
    %v277 = vcombine.high %v269, %v269
    %v278 = vcombine.high %v276, %v276
    %285 = vmatprep.subr.mxu0 0.0
    %286 = vmatpush1.msra.mxu0 %v117
    %287 = vmatprep.subr.mxu0 0.0
    %288 = vmatpush1.msra.mxu0 %v118
    %289 = vmatprep.subr.mxu0 0.0
    %290 = vmatpush1.msra.mxu0 %v119
    %291 = vmatprep.subr.mxu0 0.0
    %292 = vmatpush1.msra.mxu0 %v120
    %293 = vmatprep.subr.mxu0 0.0
    %294 = vmatpush1.msra.mxu0 %v121
    %295 = vmatprep.subr.mxu0 0.0
    %296 = vmatpush1.msra.mxu0 %v122
    %297 = vmatprep.subr.mxu0 0.0
    %298 = vmatpush1.msra.mxu0 %v123
    %299 = vmatprep.subr.mxu0 0.0
    %300 = vmatpush1.msra.mxu0 %v124
    %301 = vmatprep.subr.mxu0 0.0
    %302 = vmatpush1.msra.mxu0 %v125
    %303 = vmatprep.subr.mxu0 0.0
    %304 = vmatpush1.msra.mxu0 %v126
    %305 = vmatprep.subr.mxu0 0.0
    %306 = vmatpush1.msra.mxu0 %v127
    %307 = vmatprep.subr.mxu0 0.0
    %308 = vmatpush1.msra.mxu0 %v128
    %309 = vmatprep.subr.mxu0 0.0
    %310 = vmatpush1.msra.mxu0 %v129
    %311 = vmatprep.subr.mxu0 0.0
    %312 = vmatpush1.msra.mxu0 %v130
    %313 = vmatprep.subr.mxu0 0.0
    %314 = vmatpush1.msra.mxu0 %v131
    %315 = vmatprep.subr.mxu0 0.0
    %316 = vmatpush1.msra.mxu0 %v132
    %317 = vmatprep.subr.mxu0 0.0
    %318 = vmatpush1.msra.mxu0 %v133
    %319 = vmatprep.subr.mxu0 0.0
    %320 = vmatpush1.msra.mxu0 %v134
    %321 = vmatprep.subr.mxu0 0.0
    %322 = vmatpush1.msra.mxu0 %v135
    %323 = vmatprep.subr.mxu0 0.0
    %324 = vmatpush1.msra.mxu0 %v136
    %325 = vmatprep.subr.mxu0 0.0
    %326 = vmatpush1.msra.mxu0 %v137
    %327 = vmatprep.subr.mxu0 0.0
    %328 = vmatpush1.msra.mxu0 %v138
    %329 = vmatprep.subr.mxu0 0.0
    %330 = vmatpush1.msra.mxu0 %v139
    %331 = vmatprep.subr.mxu0 0.0
    %332 = vmatpush1.msra.mxu0 %v140
    %333 = vmatprep.subr.mxu0 0.0
    %334 = vmatpush1.msra.mxu0 %v141
    %335 = vmatprep.subr.mxu0 0.0
    %336 = vmatpush1.msra.mxu0 %v142
    %337 = vmatprep.subr.mxu0 0.0
    %338 = vmatpush1.msra.mxu0 %v143
    %339 = vmatprep.subr.mxu0 0.0
    %340 = vmatpush1.msra.mxu0 %v144
    %341 = vmatprep.subr.mxu0 0.0
    %342 = vmatpush1.msra.mxu0 %v145
    %343 = vmatprep.subr.mxu0 0.0
    %344 = vmatpush1.msra.mxu0 %v146
    %345 = vmatprep.subr.mxu0 0.0
    %346 = vmatpush1.msra.mxu0 %v147
    %347 = vmatprep.subr.mxu0 0.0
    %348 = vmatpush1.msra.mxu0 %v148
    %349 = vmatprep.mubr.f32.mxu0 %v107
    %350 = vmatmul.mubr.f32.gmra.mrb[0].mxu0 %v106
    %v351 = vpop.f32.mrb[0].mxu0
    %v352 = vadd.f32 %v252, %v351
    %v353 = vpop.f32.mrb[0].mxu0
    %354 = vdwg.mxu0
    %355 = vmatprep.subr.mxu0 0.0
    %356 = vmatpush1.msra.mxu0 %v149
    %357 = vmatprep.subr.mxu0 0.0
    %358 = vmatpush1.msra.mxu0 %v150
    %359 = vmatprep.subr.mxu0 0.0
    %360 = vmatpush1.msra.mxu0 %v151
    %361 = vmatprep.subr.mxu0 0.0
    %362 = vmatpush1.msra.mxu0 %v152
    %363 = vmatprep.subr.mxu0 0.0
    %364 = vmatpush1.msra.mxu0 %v153
    %365 = vmatprep.subr.mxu0 0.0
    %366 = vmatpush1.msra.mxu0 %v154
    %367 = vmatprep.subr.mxu0 0.0
    %368 = vmatpush1.msra.mxu0 %v155
    %369 = vmatprep.subr.mxu0 0.0
    %370 = vmatpush1.msra.mxu0 %v156
    %371 = vmatprep.subr.mxu0 0.0
    %372 = vmatpush1.msra.mxu0 %v157
    %373 = vmatprep.subr.mxu0 0.0
    %374 = vmatpush1.msra.mxu0 %v158
    %375 = vmatprep.subr.mxu0 0.0
    %376 = vmatpush1.msra.mxu0 %v159
    %377 = vmatprep.subr.mxu0 0.0
    %378 = vmatpush1.msra.mxu0 %v160
    %379 = vmatprep.subr.mxu0 0.0
    %380 = vmatpush1.msra.mxu0 %v161
    %381 = vmatprep.subr.mxu0 0.0
    %382 = vmatpush1.msra.mxu0 %v162
    %383 = vmatprep.subr.mxu0 0.0
    %384 = vmatpush1.msra.mxu0 %v163
    %385 = vmatprep.subr.mxu0 0.0
    %386 = vmatpush1.msra.mxu0 %v164
    %387 = vmatprep.subr.mxu0 0.0
    %388 = vmatpush1.msra.mxu0 %v165
    %389 = vmatprep.subr.mxu0 0.0
    %390 = vmatpush1.msra.mxu0 %v166
    %391 = vmatprep.subr.mxu0 0.0
    %392 = vmatpush1.msra.mxu0 %v167
    %393 = vmatprep.subr.mxu0 0.0
    %394 = vmatpush1.msra.mxu0 %v168
    %395 = vmatprep.subr.mxu0 0.0
    %396 = vmatpush1.msra.mxu0 %v169
    %397 = vmatprep.subr.mxu0 0.0
    %398 = vmatpush1.msra.mxu0 %v170
    %399 = vmatprep.subr.mxu0 0.0
    %400 = vmatpush1.msra.mxu0 %v171
    %401 = vmatprep.subr.mxu0 0.0
    %402 = vmatpush1.msra.mxu0 %v172
    %403 = vmatprep.subr.mxu0 0.0
    %404 = vmatpush1.msra.mxu0 %v173
    %405 = vmatprep.subr.mxu0 0.0
    %406 = vmatpush1.msra.mxu0 %v174
    %407 = vmatprep.subr.mxu0 0.0
    %408 = vmatpush1.msra.mxu0 %v175
    %409 = vmatprep.subr.mxu0 0.0
    %410 = vmatpush1.msra.mxu0 %v176
    %411 = vmatprep.subr.mxu0 0.0
    %412 = vmatpush1.msra.mxu0 %v177
    %413 = vmatprep.subr.mxu0 0.0
    %414 = vmatpush1.msra.mxu0 %v178
    %415 = vmatprep.subr.mxu0 0.0
    %416 = vmatpush1.msra.mxu0 %v179
    %417 = vmatprep.subr.mxu0 0.0
    %418 = vmatpush1.msra.mxu0 %v180
    %419 = vmatprep.mubr.f32.mxu0 %v261
    %420 = vmatmul.mubr.f32.gmra.mrb[0].mxu0 %v260
    %v421 = vpop.f32.mrb[0].mxu0
    %v422 = vadd.f32 %v352, %v421
    %v423 = vpop.f32.mrb[0].mxu0
    %424 = vdwg.mxu0
    %425 = vmatprep.subr.mxu0 0.0
    %426 = vmatpush1.msra.mxu0 %v181
    %427 = vmatprep.subr.mxu0 0.0
    %428 = vmatpush1.msra.mxu0 %v182
    %429 = vmatprep.subr.mxu0 0.0
    %430 = vmatpush1.msra.mxu0 %v183
    %431 = vmatprep.subr.mxu0 0.0
    %432 = vmatpush1.msra.mxu0 %v184
    %433 = vmatprep.subr.mxu0 0.0
    %434 = vmatpush1.msra.mxu0 %v185
    %435 = vmatprep.subr.mxu0 0.0
    %436 = vmatpush1.msra.mxu0 %v186
    %437 = vmatprep.subr.mxu0 0.0
    %438 = vmatpush1.msra.mxu0 %v187
    %439 = vmatprep.subr.mxu0 0.0
    %440 = vmatpush1.msra.mxu0 %v188
    %441 = vmatprep.subr.mxu0 0.0
    %442 = vmatpush1.msra.mxu0 %v189
    %443 = vmatprep.subr.mxu0 0.0
    %444 = vmatpush1.msra.mxu0 %v190
    %445 = vmatprep.subr.mxu0 0.0
    %446 = vmatpush1.msra.mxu0 %v191
    %447 = vmatprep.subr.mxu0 0.0
    %448 = vmatpush1.msra.mxu0 %v192
    %449 = vmatprep.subr.mxu0 0.0
    %450 = vmatpush1.msra.mxu0 %v193
    %451 = vmatprep.subr.mxu0 0.0
    %452 = vmatpush1.msra.mxu0 %v194
    %453 = vmatprep.subr.mxu0 0.0
    %454 = vmatpush1.msra.mxu0 %v195
    %455 = vmatprep.subr.mxu0 0.0
    %456 = vmatpush1.msra.mxu0 %v196
    %457 = vmatprep.subr.mxu0 0.0
    %458 = vmatpush1.msra.mxu0 %v197
    %459 = vmatprep.subr.mxu0 0.0
    %460 = vmatpush1.msra.mxu0 %v198
    %461 = vmatprep.subr.mxu0 0.0
    %462 = vmatpush1.msra.mxu0 %v199
    %463 = vmatprep.subr.mxu0 0.0
    %464 = vmatpush1.msra.mxu0 %v200
    %465 = vmatprep.subr.mxu0 0.0
    %466 = vmatpush1.msra.mxu0 %v201
    %467 = vmatprep.subr.mxu0 0.0
    %468 = vmatpush1.msra.mxu0 %v202
    %469 = vmatprep.subr.mxu0 0.0
    %470 = vmatpush1.msra.mxu0 %v203
    %471 = vmatprep.subr.mxu0 0.0
    %472 = vmatpush1.msra.mxu0 %v204
    %473 = vmatprep.subr.mxu0 0.0
    %474 = vmatpush1.msra.mxu0 %v205
    %475 = vmatprep.subr.mxu0 0.0
    %476 = vmatpush1.msra.mxu0 %v206
    %477 = vmatprep.subr.mxu0 0.0
    %478 = vmatpush1.msra.mxu0 %v207
    %479 = vmatprep.subr.mxu0 0.0
    %480 = vmatpush1.msra.mxu0 %v208
    %481 = vmatprep.subr.mxu0 0.0
    %482 = vmatpush1.msra.mxu0 %v209
    %483 = vmatprep.subr.mxu0 0.0
    %484 = vmatpush1.msra.mxu0 %v210
    %485 = vmatprep.subr.mxu0 0.0
    %486 = vmatpush1.msra.mxu0 %v211
    %487 = vmatprep.subr.mxu0 0.0
    %488 = vmatpush1.msra.mxu0 %v212
    %489 = vmatprep.mubr.f32.mxu0 %v277
    %490 = vmatmul.mubr.f32.gmra.mrb[0].mxu0 %v269
    %v491 = vpop.f32.mrb[0].mxu0
    %v492 = vadd.f32 %v422, %v491
    %v493 = vpop.f32.mrb[0].mxu0
    %494 = vdwg.mxu0
    %495 = vmatprep.subr.mxu0 0.0
    %496 = vmatpush1.msra.mxu0 %v213
    %497 = vmatprep.subr.mxu0 0.0
    %498 = vmatpush1.msra.mxu0 %v214
    %499 = vmatprep.subr.mxu0 0.0
    %500 = vmatpush1.msra.mxu0 %v215
    %501 = vmatprep.subr.mxu0 0.0
    %502 = vmatpush1.msra.mxu0 %v216
    %503 = vmatprep.subr.mxu0 0.0
    %504 = vmatpush1.msra.mxu0 %v217
    %505 = vmatprep.subr.mxu0 0.0
    %506 = vmatpush1.msra.mxu0 %v218
    %507 = vmatprep.subr.mxu0 0.0
    %508 = vmatpush1.msra.mxu0 %v219
    %509 = vmatprep.subr.mxu0 0.0
    %510 = vmatpush1.msra.mxu0 %v220
    %511 = vmatprep.subr.mxu0 0.0
    %512 = vmatpush1.msra.mxu0 %v221
    %513 = vmatprep.subr.mxu0 0.0
    %514 = vmatpush1.msra.mxu0 %v222
    %515 = vmatprep.subr.mxu0 0.0
    %516 = vmatpush1.msra.mxu0 %v223
    %517 = vmatprep.subr.mxu0 0.0
    %518 = vmatpush1.msra.mxu0 %v224
    %519 = vmatprep.subr.mxu0 0.0
    %520 = vmatpush1.msra.mxu0 %v225
    %521 = vmatprep.subr.mxu0 0.0
    %522 = vmatpush1.msra.mxu0 %v226
    %523 = vmatprep.subr.mxu0 0.0
    %524 = vmatpush1.msra.mxu0 %v227
    %525 = vmatprep.subr.mxu0 0.0
    %526 = vmatpush1.msra.mxu0 %v228
    %527 = vmatprep.subr.mxu0 0.0
    %528 = vmatpush1.msra.mxu0 %v229
    %529 = vmatprep.subr.mxu0 0.0
    %530 = vmatpush1.msra.mxu0 %v230
    %531 = vmatprep.subr.mxu0 0.0
    %532 = vmatpush1.msra.mxu0 %v231
    %533 = vmatprep.subr.mxu0 0.0
    %534 = vmatpush1.msra.mxu0 %v232
    %535 = vmatprep.subr.mxu0 0.0
    %536 = vmatpush1.msra.mxu0 %v233
    %537 = vmatprep.subr.mxu0 0.0
    %538 = vmatpush1.msra.mxu0 %v234
    %539 = vmatprep.subr.mxu0 0.0
    %540 = vmatpush1.msra.mxu0 %v235
    %541 = vmatprep.subr.mxu0 0.0
    %542 = vmatpush1.msra.mxu0 %v236
    %543 = vmatprep.subr.mxu0 0.0
    %544 = vmatpush1.msra.mxu0 %v237
    %545 = vmatprep.subr.mxu0 0.0
    %546 = vmatpush1.msra.mxu0 %v238
    %547 = vmatprep.subr.mxu0 0.0
    %548 = vmatpush1.msra.mxu0 %v239
    %549 = vmatprep.subr.mxu0 0.0
    %550 = vmatpush1.msra.mxu0 %v240
    %551 = vmatprep.subr.mxu0 0.0
    %552 = vmatpush1.msra.mxu0 %v241
    %553 = vmatprep.subr.mxu0 0.0
    %554 = vmatpush1.msra.mxu0 %v242
    %555 = vmatprep.subr.mxu0 0.0
    %556 = vmatpush1.msra.mxu0 %v243
    %557 = vmatprep.subr.mxu0 0.0
    %558 = vmatpush1.msra.mxu0 %v244
    %559 = vmatprep.mubr.f32.mxu0 %v278
    %560 = vmatmul.mubr.f32.gmra.mrb[0].mxu0 %v276
    %v561 = vpop.f32.mrb[0].mxu0
    %v562 = vadd.f32 %v492, %v561
    %v563 = vpop.f32.mrb[0].mxu0
    %564 = vdwg.mxu0
    %v565 = vld [vmem:[%s3] sm:$0x1]
    %v567 = vlaneseq
    %v568 = vshrl.u32 %v567, 7
    %v569 = vsub.s32 0, %v568
    %v570 = vrot.slane %v565, %v569
    %v572 = vadd.f32 %v562, %v570
    %v573 = vtanh.pop %v572
    %v574 = vmul.f32 %v573, %v573
    %vm575 = vcmask 254976
    %v576 = vsel %vm575, %v574, 0.0
    %577 = vadd.xlane.f32.xlu0 %v576
    %v578 = vpop.xlane.xlu0 %577
    %v579 = vmax.f32 %v578, 1e-24
    %v580 = vrsqrt.pop %v579
    %v581 = vmul.f32 %v573, %v580
    %582 = vst.msk [vmem:[#allocation2] sm:$0x3] %vm575, %v581
    // Predicated region
    $region18: #{tpu_custom_call.1} parent=1 // pred_check
      _
    $region19: #{tpu_custom_call.1} parent=1 // pred_check_branch
      %584 = sbr.rel (0) target = $region21
    $region20: #{tpu_custom_call.1} parent=1 // pred_region
      %s586 = ssub.s32 32, 32
      %587 = vsyncadd [#allocation3], %s586
      %s589 = sshll.u32 [#allocation2], 4
      %s590 = int_to_ptr.vmem [resolvable:$true] %s589
      %592 = dma.vmem_to_hbm [thread:$0]  %s590, 32, %s4, [#allocation3]
    $region21: #{tpu_custom_call.1} parent=1 // pred_fallthru
      _
    // Predicated region
    $region22: #{tpu_custom_call.1} parent=1 // pred_check
      _
    $region23: #{tpu_custom_call.1} parent=1 // pred_check_branch
      %594 = sbr.rel (0) target = $region25
    $region24: #{tpu_custom_call.1} parent=1 // pred_region
      %595 = dma.done [#allocation3], 32
    $region25: #{tpu_custom_call.1} parent=1 // pred_fallthru
      _
    %596 = vsyncpa [#allocation3], 1

</llo_original>
